<compile_context>
chip_gen: v5e
topology: v5e:2x2
jax: 0.10.0
libtpu: 0.0.40
codegen_flags: <defaults>
</compile_context>

<pallas_src>
import functools

import jax
import jax.numpy as jnp
from jax.experimental import pallas as pl
from jax.experimental.pallas import tpu as pltpu


def _round_up(x, m):
    return -(-x // m) * m


def _masker_kernel(img_ref, q_ref, soft_ref, pos_ref, *, w, b, tn):
    # img_ref : (1, C, ts)   lane tile of the current batch element
    # q_ref   : (tn, C)      current tile of the (gathered) query embeddings
    # soft_ref: (1, tn, ts)  soft mask tile for the current query tile
    # pos_ref : (1, 1, ts)   positive (diagonal) query's soft mask tile;
    #                        resident across the innermost query-tile axis.
    bidx = pl.program_id(0)
    nidx = pl.program_id(2)

    # MXU: [tn, C] @ [C, ts], f32 accumulation.
    sim = jnp.dot(q_ref[...], img_ref[0], preferred_element_type=jnp.float32)
    logits = sim * w + b
    # sigmoid(x) == 0.5 * (tanh(0.5 * x) + 1): a single EUP push per element
    # instead of exp + reciprocal.
    soft = 0.5 * (jnp.tanh(0.5 * logits) + 1.0)
    soft_ref[0] = soft.astype(soft_ref.dtype)

    # Positive (diagonal) row: global query index == batch index (rank 0).
    # TODO(synk): under data parallelism pass pos_index = b + B*rank via
    # scalar prefetch instead of deriving it from program_id(0).
    row0 = nidx * tn
    @pl.when((bidx >= row0) & (bidx < row0 + tn))
    def _():
        gids = row0 + jax.lax.broadcasted_iota(jnp.int32, soft.shape, 0)
        pos = jnp.sum(jnp.where(gids == bidx, soft, 0.0), axis=0, keepdims=True)
        pos_ref[0] = pos.astype(pos_ref.dtype)


def masker_forward(image_emb, q_emb, *, is_train=True,
                   compute_dtype=jnp.bfloat16, out_dtype=None,
                   max_lane_tile=2048, max_n_tile=256,
                   vmem_target_bytes=24 << 20):
    """image_emb: [B, C, H, W], q_emb: [N, C] (N = B * world_size).

    Best called under jit so the [B,C,H,W]->[B,C,S] reshape stays a layout
    no-op and any upstream bf16 cast fuses with its producer.
    """
    B, C, H, W = image_emb.shape
    N = q_emb.shape[0]
    S = H * W

    # Sim2Mask constants (not learnable in the reference code path).
    w, b = (6.0, -4.0) if is_train else (10.0, -2.5)

    if out_dtype is None:
        out_dtype = image_emb.dtype
    if compute_dtype is not None and image_emb.dtype != compute_dtype:
        image_emb = image_emb.astype(compute_dtype)
    if compute_dtype is not None and q_emb.dtype != compute_dtype:
        q_emb = q_emb.astype(compute_dtype)

    in_itm = image_emb.dtype.itemsize
    out_itm = jnp.dtype(out_dtype).itemsize

    # --- query (N) tiling: bounds the f32 [tn, ts] intermediate and the soft
    # output double-buffer when N = B*world_size is large (v7x: 64 MiB VMEM).
    if N <= max_n_tile:
        tn = N
    else:
        tn = max(8, (max_n_tile // 8) * 8)
    num_n_tiles = pl.cdiv(N, tn)

    # --- lane (S = H*W) tiling: no host-side padding, no output slicing.
    # Pick the largest tile that keeps the double-buffered working set under
    # vmem_target_bytes; Pallas masks the ragged last tile.
    fixed = 2 * tn * C * in_itm                                  # q dbl-buffer
    per_lane = (2 * (C * in_itm + tn * out_itm + out_itm)        # img+soft+pos
                + 2 * tn * 4)                                    # f32 temps
    ts_budget = max(128, (vmem_target_bytes - fixed) // per_lane)
    max_tile = int(min(max_lane_tile, ts_budget))
    # v7x megacore: make sure there are >= 2 parallel grid steps.
    if B * num_n_tiles < 2 and S > 256:
        max_tile = min(max_tile, _round_up(pl.cdiv(S, 2), 128))
    if S <= max_tile:
        ts = S                       # full lane extent (legal even if S % 128 != 0)
    else:
        ts = max(128, (max_tile // 128) * 128)
    num_s_tiles = pl.cdiv(S, ts)

    img_flat = image_emb.reshape(B, C, S)

    kernel = functools.partial(_masker_kernel, w=w, b=b, tn=tn)

    est_vmem = fixed + per_lane * ts
    vmem_limit = int(min(max(2 * est_vmem + (4 << 20), 24 << 20), 48 << 20))

    cost = pl.CostEstimate(
        flops=2 * B * N * C * S,
        transcendentals=B * N * S,
        bytes_accessed=int(B * C * S * in_itm + N * C * in_itm
                           + (B * N * S + B * S) * out_itm),
    )

    soft_flat, pos_flat = pl.pallas_call(
        kernel,
        out_shape=(
            jax.ShapeDtypeStruct((B, N, S), out_dtype),
            jax.ShapeDtypeStruct((B, 1, S), out_dtype),
        ),
        grid_spec=pltpu.PrefetchScalarGridSpec(
            num_scalar_prefetch=0,
            grid=(B, num_s_tiles, num_n_tiles),
            in_specs=[
                pl.BlockSpec((1, C, ts), lambda bi, si, ni: (bi, 0, si)),
                pl.BlockSpec((tn, C), lambda bi, si, ni: (ni, 0)),
            ],
            out_specs=[
                pl.BlockSpec((1, tn, ts), lambda bi, si, ni: (bi, ni, si)),
                pl.BlockSpec((1, 1, ts), lambda bi, si, ni: (bi, 0, si)),
            ],
        ),
        compiler_params=pltpu.CompilerParams(
            dimension_semantics=("parallel", "parallel", "arbitrary"),
            vmem_limit_bytes=vmem_limit,
        ),
        cost_estimate=cost,
    )(img_flat, q_emb)

    soft_all = soft_flat.reshape(B, N, H, W)
    soft_pos = pos_flat.reshape(B, 1, H, W)
    return {"soft_pos": soft_pos, "soft_all": soft_all}


def _reference(image_emb, q_emb, *, is_train=True):
    w, b = (6.0, -4.0) if is_train else (10.0, -2.5)
    simmap = jnp.einsum("bchw,nc->bnhw",
                        image_emb.astype(jnp.float32),
                        q_emb.astype(jnp.float32))
    soft = jax.nn.sigmoid(simmap * w + b)
    B = image_emb.shape[0]
    idx = jnp.arange(B)
    return {"soft_pos": soft[idx, idx][:, None], "soft_all": soft}


def _check(B, C, H, W, N=None, *, is_train, seed, atol, **fwd_kwargs):
    if N is None:
        N = B  # world_size == 1
    key = jax.random.fold_in(jax.random.PRNGKey(0), seed)
    k_img, k_q = jax.random.split(key)
    # (TCL normalizes embeddings upstream; 0.1 scale keeps sims in a sane range.)
    image_emb = jax.random.normal(k_img, (B, C, H, W), dtype=jnp.float32) * 0.1
    q_emb = jax.random.normal(k_q, (N, C), dtype=jnp.float32) * 0.1

    fwd = jax.jit(functools.partial(masker_forward, is_train=is_train, **fwd_kwargs))
    masks = fwd(image_emb, q_emb)
    jax.block_until_ready(masks)

    ref = _reference(image_emb, q_emb, is_train=is_train)
    assert masks["soft_all"].shape == (B, N, H, W)
    assert masks["soft_pos"].shape == (B, 1, H, W)
    soft_all = masks["soft_all"].astype(jnp.float32)
    soft_pos = masks["soft_pos"].astype(jnp.float32)
    # Tolerances account for TPU matmul input rounding to bf16 (default
    # precision) on either side; outputs are sigmoid-bounded in [0, 1].
    assert jnp.allclose(soft_all, ref["soft_all"], atol=atol, rtol=0.0), \
        f"soft_all mismatch, max err {jnp.max(jnp.abs(soft_all - ref['soft_all']))}"
    assert jnp.allclose(soft_pos, ref["soft_pos"], atol=atol, rtol=0.0), \
        f"soft_pos mismatch, max err {jnp.max(jnp.abs(soft_pos - ref['soft_pos']))}"


if __name__ == "__main__":
    # f32 compute path, lane-aligned spatial size (S = 256).
    _check(2, 64, 16, 16, is_train=True, seed=0, atol=5e-3,
           compute_dtype=jnp.float32)
    # Non-128-multiple spatial size (S = 196): ragged lane tile, no pad/slice.
    _check(2, 32, 14, 14, is_train=False, seed=1, atol=5e-3,
           compute_dtype=jnp.float32)
    # Gathered queries (N = B*world_size = 16 > B) with the query axis tiled
    # (tn = 8 -> 2 query tiles) to exercise the resident positive-row output.
    _check(2, 64, 16, 16, N=16, is_train=True, seed=2, atol=5e-3,
           compute_dtype=jnp.float32, max_n_tile=8)
    # Default bf16 inputs (halves HBM read traffic); f32 MXU accumulation.
    _check(2, 64, 16, 16, is_train=True, seed=3, atol=2e-2)
    print("KERNEL_OK")
</pallas_src>

<mosaic_0001>
module attributes {stable_mosaic.version = 11 : i64} {
  func.func @_masker_kernel(%arg0: i32, %arg1: i32, %arg2: i32, %arg3: memref<1x64x256xf32, #tpu.memory_space<vmem>>, %arg4: memref<2x64xf32, #tpu.memory_space<vmem>>, %arg5: memref<1x2x256xf32, #tpu.memory_space<vmem>>, %arg6: memref<1x1x256xf32, #tpu.memory_space<vmem>>) attributes {dimension_semantics = [#tpu.dimension_semantics<parallel>, #tpu.dimension_semantics<parallel>, #tpu.dimension_semantics<arbitrary>], iteration_bounds = array<i64: 2, 1, 1>, scalar_prefetch = 0 : i64, scratch_operands = 0 : i64, tpu.core_type = #tpu.core_type<tc>, window_params = [{transform_indices = @transform_0, window_bounds = array<i64: 1, 64, 256>}, {transform_indices = @transform_1, window_bounds = array<i64: 2, 64>}, {transform_indices = @transform_2, window_bounds = array<i64: 1, 2, 256>}, {transform_indices = @transform_3, window_bounds = array<i64: 1, 1, 256>}]} {
    %c0 = arith.constant 0 : index
    %c0_0 = arith.constant 0 : index
    %0 = vector.load %arg4[%c0, %c0_0] : memref<2x64xf32, #tpu.memory_space<vmem>>, vector<2x64xf32>
    %c0_1 = arith.constant 0 : index
    %c0_2 = arith.constant 0 : index
    %c0_3 = arith.constant 0 : index
    %1 = vector.load %arg3[%c0_1, %c0_2, %c0_3] : memref<1x64x256xf32, #tpu.memory_space<vmem>>, vector<1x64x256xf32>
    %2 = vector.shape_cast %1 : vector<1x64x256xf32> to vector<64x256xf32>
    %cst = arith.constant dense<0.000000e+00> : vector<2x256xf32>
    %3 = tpu.matmul %0, %2, %cst {dimension_numbers = #tpu.dot_dimension_numbers<[1], [0], [0], [1], [0, 0, 1, 1], [], []>} : vector<2x64xf32>, vector<64x256xf32>, vector<2x256xf32> -> vector<2x256xf32>
    %cst_4 = arith.constant 6.000000e+00 : f32
    %4 = vector.broadcast %cst_4 : f32 to vector<2x256xf32>
    %5 = arith.mulf %3, %4 : vector<2x256xf32>
    %cst_5 = arith.constant -4.000000e+00 : f32
    %6 = vector.broadcast %cst_5 : f32 to vector<2x256xf32>
    %7 = arith.addf %5, %6 : vector<2x256xf32>
    %cst_6 = arith.constant 5.000000e-01 : f32
    %8 = vector.broadcast %cst_6 : f32 to vector<2x256xf32>
    %9 = arith.mulf %8, %7 : vector<2x256xf32>
    %10 = math.tanh %9 : vector<2x256xf32>
    %cst_7 = arith.constant 1.000000e+00 : f32
    %11 = vector.broadcast %cst_7 : f32 to vector<2x256xf32>
    %12 = arith.addf %10, %11 : vector<2x256xf32>
    %cst_8 = arith.constant 5.000000e-01 : f32
    %13 = vector.broadcast %cst_8 : f32 to vector<2x256xf32>
    %14 = arith.mulf %13, %12 : vector<2x256xf32>
    %c0_9 = arith.constant 0 : index
    %c0_10 = arith.constant 0 : index
    %c0_11 = arith.constant 0 : index
    %15 = vector.load %arg5[%c0_9, %c0_10, %c0_11] : memref<1x2x256xf32, #tpu.memory_space<vmem>>, vector<1x2x256xf32>
    %16 = vector.shape_cast %15 : vector<1x2x256xf32> to vector<2x256xf32>
    %17 = vector.shape_cast %14 : vector<2x256xf32> to vector<1x2x256xf32>
    tpu.vector_store %arg5[%c0_9, %c0_10, %c0_11], %17 {strides = array<i32>} : memref<1x2x256xf32, #tpu.memory_space<vmem>>, vector<1x2x256xf32>,
    %c2_i32 = arith.constant 2 : i32
    %18 = arith.muli %arg2, %c2_i32 : i32
    %19 = arith.cmpi sge, %arg0, %18 : i32
    %c2_i32_12 = arith.constant 2 : i32
    %20 = arith.addi %18, %c2_i32_12 : i32
    %21 = arith.cmpi slt, %arg0, %20 : i32
    %22 = arith.andi %19, %21 : i1
    %23 = arith.extui %22 : i1 to i32
    %c0_i32 = arith.constant 0 : i32
    %24 = arith.cmpi ne, %23, %c0_i32 : i32
    scf.if %24 {
      %25 = tpu.iota {dimensions = array<i32: 0>} : vector<2x256xi32>
      %26 = vector.broadcast %18 : i32 to vector<2x256xi32>
      %27 = arith.addi %26, %25 : vector<2x256xi32>
      %28 = vector.broadcast %arg0 : i32 to vector<2x256xi32>
      %29 = arith.cmpi eq, %27, %28 : vector<2x256xi32>
      %cst_13 = arith.constant 0.000000e+00 : f32
      %30 = vector.broadcast %cst_13 : f32 to vector<2x256xf32>
      %31 = arith.select %29, %14, %30 : vector<2x256xi1>, vector<2x256xf32>
      %cst_14 = arith.constant dense<0.000000e+00> : vector<256xf32>
      %32 = vector.multi_reduction <add>, %31, %cst_14 [0] : vector<2x256xf32> to vector<256xf32>
      %33 = vector.shape_cast %32 : vector<256xf32> to vector<1x256xf32>
      %c0_15 = arith.constant 0 : index
      %c0_16 = arith.constant 0 : index
      %c0_17 = arith.constant 0 : index
      %34 = vector.load %arg6[%c0_15, %c0_16, %c0_17] : memref<1x1x256xf32, #tpu.memory_space<vmem>>, vector<1x1x256xf32>
      %35 = vector.shape_cast %34 : vector<1x1x256xf32> to vector<1x256xf32>
      %36 = vector.shape_cast %33 : vector<1x256xf32> to vector<1x1x256xf32>
      tpu.vector_store %arg6[%c0_15, %c0_16, %c0_17], %36 {strides = array<i32>} : memref<1x1x256xf32, #tpu.memory_space<vmem>>, vector<1x1x256xf32>,
    } else {
    }
    return
  }
  func.func @transform_0(%arg0: i32, %arg1: i32, %arg2: i32) -> (i32, i32, i32) {
    %c0_i32 = arith.constant 0 : i32
    %c0_i32_0 = arith.constant 0 : i32
    return %arg0, %c0_i32, %arg1 : i32, i32, i32
  }
  func.func @transform_1(%arg0: i32, %arg1: i32, %arg2: i32) -> (i32, i32) {
    %c0_i32 = arith.constant 0 : i32
    %c0_i32_0 = arith.constant 0 : i32
    return %arg2, %c0_i32 : i32, i32
  }
  func.func @transform_2(%arg0: i32, %arg1: i32, %arg2: i32) -> (i32, i32, i32) {
    %c0_i32 = arith.constant 0 : i32
    return %arg0, %arg2, %arg1 : i32, i32, i32
  }
  func.func @transform_3(%arg0: i32, %arg1: i32, %arg2: i32) -> (i32, i32, i32) {
    %c0_i32 = arith.constant 0 : i32
    %c0_i32_0 = arith.constant 0 : i32
    return %arg0, %c0_i32, %arg1 : i32, i32, i32
  }
}

</mosaic_0001>

<llo_original>
// kernel: masker_forward.1
$region0: #{masker_forward.1}
  #allocation0 [shape = 'u32[]', space=smem, size = 0x4, offset = 0x4, fixed_abs, tag = 'smem constant byte address 0x4 - core index']
  #allocation1 [shape = 'u32[72,128]{1,0:T(1,128)}', space=vmem, size = 0x9000, scoped, tag = 'internal scratch']
  %s0 = inlined_call_operand.vmem [shape: f32[2,64,256], index: 0, kind: input, shape index: {}]
  %s1 = inlined_call_operand.vmem [shape: f32[2,64], index: 1, kind: input, shape index: {}]
  %s2 = inlined_call_operand.vmem [shape: f32[2,2,256], index: 2, kind: output, shape index: {0}]
  %s3 = inlined_call_operand.vmem [shape: f32[2,1,256], index: 3, kind: output, shape index: {1}]
  %4 = xla_tuple %s2, %s3
  %s5 = sld [smem:[#allocation0]]
  $region53: #{masker_forward.1} parent=0
    _
  %s7 = ssub.s32 1, %s5
  %s8 = scalar_select 0, %s7, %s5
  loop: start=0, step=1, limit=4
  $region2: #{masker_forward.1} parent=0 // loop_pre_header
    _
  $region3: #{masker_forward.1} parent=0 // loop_header
    %s10 = sphi 0, %s14
    %p11 = scmp.ge.s32.totalorder %s10, 4
    %s17 = sphi 0, %s36
    %s18 = sphi 0, %s32
    %s19 = sphi 0, %s28
    %s20 = sphi 0, %s17
    %s21 = sphi 0, %s18
    %s22 = sphi 0, %s19
    %s23 = sphi 0, %s20
    %s24 = sphi 0, %s21
    %s25 = sphi 0, %s22
    %s41 = sphi 0, %s43
    %s44 = sphi 0, %s41
    %s45 = sphi 0, %s44
    %s61 = sphi 0, %s45
    %s67 = sphi 0, %s69
    %s70 = sphi 0, %s67
    %s71 = sphi 0, %s70
    %s87 = sphi 0, %s71
    %s97 = sphi 0, %s99
    %s100 = sphi 0, %s97
    %s101 = sphi 0, %s100
    %s117 = sphi 0, %s101
    %s125 = sphi 0, %s127
    %s128 = sphi 0, %s125
    %s129 = sphi 0, %s128
    %s145 = sphi 0, %s129
  $region4: #{masker_forward.1} parent=0 // loop_header_branch
    %13 = sbr.rel (%p11) target = $region8
  $region5: #{masker_forward.1} parent=0 // loop_body
    %s15 = ssub.s32 %s10, 1
    %s16 = ssub.s32 %s10, 2
    %s26 = sadd.s32 1, %s19
    %p27 = scmp.ge.s32.totalorder %s26, 1
    %s28 = scalar_select %p27, 0, %s26
    %s29 = sadd.s32 1, %s18
    %s30 = scalar_select %p27, %s29, %s18
    %p31 = scmp.ge.s32.totalorder %s30, 1
    %s32 = scalar_select %p31, 0, %s30
    %s33 = sadd.s32 1, %s17
    %s34 = scalar_select %p31, %s33, %s17
    %p35 = scmp.ge.s32.totalorder %s34, 2
    %s36 = scalar_select %p35, 0, %s34
    %s37 = ssub.s32 %s17, %s36
    %s38 = ssub.s32 %s18, %s32
    %s39 = sor.u32 %s37, %s38
    %p40 = scmp.eq.s32.totalorder %s39, 0
    %s42 = sadd.s32 %s41, 1
    %s43 = scalar_select %p40, %s41, %s42
    %p46 = pneg %p40
    %p47 = scmp.eq.s32.totalorder %s10, 1
    %p48 = por %p46, %p47
    %p49 = scmp.ne.s32.totalorder %s41, %s44
    %p50 = scmp.eq.s32.totalorder %s10, 0
    %p51 = por %p49, %p50
    %p52 = scmp.ne.s32.totalorder %s41, %s44
    %p53 = scmp.eq.s32.totalorder %s15, 1
    %p54 = por %p52, %p53
    %p55 = scmp.ne.s32.totalorder %s44, %s45
    %p56 = scmp.eq.s32.totalorder %s15, 0
    %p57 = por %p55, %p56
    %p58 = scmp.ne.s32.totalorder %s44, %s45
    %p59 = scmp.eq.s32.totalorder %s16, 1
    %p60 = por %p58, %p59
    %p62 = scmp.ne.s32.totalorder %s45, %s61
    %p63 = scmp.eq.s32.totalorder %s16, 0
    %p64 = por %p62, %p63
    %s65 = ssub.s32 %s19, %s28
    %p66 = scmp.eq.s32.totalorder %s65, 0
    %s68 = sadd.s32 %s67, 1
    %s69 = scalar_select %p66, %s67, %s68
    %p72 = pneg %p66
    %p73 = scmp.eq.s32.totalorder %s10, 1
    %p74 = por %p72, %p73
    %p75 = scmp.ne.s32.totalorder %s67, %s70
    %p76 = scmp.eq.s32.totalorder %s10, 0
    %p77 = por %p75, %p76
    %p78 = scmp.ne.s32.totalorder %s67, %s70
    %p79 = scmp.eq.s32.totalorder %s15, 1
    %p80 = por %p78, %p79
    %p81 = scmp.ne.s32.totalorder %s70, %s71
    %p82 = scmp.eq.s32.totalorder %s15, 0
    %p83 = por %p81, %p82
    %p84 = scmp.ne.s32.totalorder %s70, %s71
    %p85 = scmp.eq.s32.totalorder %s16, 1
    %p86 = por %p84, %p85
    %p88 = scmp.ne.s32.totalorder %s71, %s87
    %p89 = scmp.eq.s32.totalorder %s16, 0
    %p90 = por %p88, %p89
    %s91 = ssub.s32 %s17, %s36
    %s92 = ssub.s32 %s19, %s28
    %s93 = sor.u32 %s91, %s92
    %s94 = ssub.s32 %s18, %s32
    %s95 = sor.u32 %s93, %s94
    %p96 = scmp.eq.s32.totalorder %s95, 0
    %s98 = sadd.s32 %s97, 1
    %s99 = scalar_select %p96, %s97, %s98
    %p102 = pneg %p96
    %p103 = scmp.eq.s32.totalorder %s10, 1
    %p104 = por %p102, %p103
    %p105 = scmp.ne.s32.totalorder %s97, %s100
    %p106 = scmp.eq.s32.totalorder %s10, 0
    %p107 = por %p105, %p106
    %p108 = scmp.ne.s32.totalorder %s97, %s100
    %p109 = scmp.eq.s32.totalorder %s15, 1
    %p110 = por %p108, %p109
    %p111 = scmp.ne.s32.totalorder %s100, %s101
    %p112 = scmp.eq.s32.totalorder %s15, 0
    %p113 = por %p111, %p112
    %p114 = scmp.ne.s32.totalorder %s100, %s101
    %p115 = scmp.eq.s32.totalorder %s16, 1
    %p116 = por %p114, %p115
    %p118 = scmp.ne.s32.totalorder %s101, %s117
    %p119 = scmp.eq.s32.totalorder %s16, 0
    %p120 = por %p118, %p119
    %s121 = ssub.s32 %s17, %s36
    %s122 = ssub.s32 %s18, %s32
    %s123 = sor.u32 %s121, %s122
    %p124 = scmp.eq.s32.totalorder %s123, 0
    %s126 = sadd.s32 %s125, 1
    %s127 = scalar_select %p124, %s125, %s126
    %p130 = pneg %p124
    %p131 = scmp.eq.s32.totalorder %s10, 1
    %p132 = por %p130, %p131
    %p133 = scmp.ne.s32.totalorder %s125, %s128
    %p134 = scmp.eq.s32.totalorder %s10, 0
    %p135 = por %p133, %p134
    %p136 = scmp.ne.s32.totalorder %s125, %s128
    %p137 = scmp.eq.s32.totalorder %s15, 1
    %p138 = por %p136, %p137
    %p139 = scmp.ne.s32.totalorder %s128, %s129
    %p140 = scmp.eq.s32.totalorder %s15, 0
    %p141 = por %p139, %p140
    %p142 = scmp.ne.s32.totalorder %s128, %s129
    %p143 = scmp.eq.s32.totalorder %s16, 1
    %p144 = por %p142, %p143
    %p146 = scmp.ne.s32.totalorder %s129, %s145
    %p147 = scmp.eq.s32.totalorder %s16, 0
    %p148 = por %p146, %p147
    %p149 = scmp.le.s32.totalorder 1, %s10
    %p150 = scmp.lt.s32.totalorder %s10, 3
    %p151 = pnand %p149, %p150
    %p152 = pneg %p151
    // Predicated region
    $region9: #{masker_forward.1} parent=5 // pred_check
      _
    $region10: #{masker_forward.1} parent=5 // pred_check_branch
      %154 = sbr.rel (%p151) target = $region12
    $region11: #{masker_forward.1} parent=5 // pred_region
      %s155 = ssub.s32 %s10, 1
      // Predicated region
      $region13: #{masker_forward.1} parent=11 // pred_check
        %p156 = pneg %p83
      $region14: #{masker_forward.1} parent=11 // pred_check_branch
        %158 = sbr.rel (%p156) target = $region16
      $region15: #{masker_forward.1} parent=11 // pred_region
        %p159 = scmp.lt.s32.totalorder %s22, 0
        %s160 = scalar_select %p159, %s22, 0
        %s161 = smul.addr %s160, 2
        %s162 = scalar_lea.vmem %s1, %s161
      $region16: #{masker_forward.1} parent=11 // pred_fallthru
        _
    $region12: #{masker_forward.1} parent=5 // pred_fallthru
      _
    %p163 = scmp.lt.s32.totalorder %s10, 2
    // Predicated region
    $region17: #{masker_forward.1} parent=5 // pred_check
      %p164 = pneg %p163
    $region18: #{masker_forward.1} parent=5 // pred_check_branch
      %166 = sbr.rel (%p164) target = $region20
    $region19: #{masker_forward.1} parent=5 // pred_region
      // Predicated region
      $region21: #{masker_forward.1} parent=19 // pred_check
        %p167 = pneg %p51
      $region22: #{masker_forward.1} parent=19 // pred_check_branch
        %169 = sbr.rel (%p167) target = $region24
      $region23: #{masker_forward.1} parent=19 // pred_region
        %s170 = smul.u32 2, %s18
        %p171 = scmp.lt.s32.totalorder %s17, 1
        %s172 = scalar_select %p171, %s17, 1
        %p173 = scmp.lt.s32.totalorder %s170, 1
        %s174 = scalar_select %p173, %s170, 1
        %s175 = smul.addr %s172, 16
        %s176 = sadd.s32 %s174, %s175
        %s177 = smul.addr %s176, 8
        %s178 = scalar_lea.vmem %s0, %s177
        %s179 = smul.u32 2, %s18
      $region24: #{masker_forward.1} parent=19 // pred_fallthru
        _
    $region20: #{masker_forward.1} parent=5 // pred_fallthru
      _
    %p180 = scmp.le.s32.totalorder 1, %s10
    %p181 = scmp.lt.s32.totalorder %s10, 3
    %p182 = pnand %p180, %p181
    %p183 = pneg %p182
    // Predicated region
    $region25: #{masker_forward.1} parent=5 // pred_check
      _
    $region26: #{masker_forward.1} parent=5 // pred_check_branch
      %185 = sbr.rel (%p182) target = $region28
    $region27: #{masker_forward.1} parent=5 // pred_region
      %s186 = ssub.s32 %s10, 1
      %s187 = smul.u32 2, %s21
      %p188 = scmp.lt.s32.totalorder %s20, 1
      %s189 = scalar_select %p188, %s20, 1
      %p190 = scmp.lt.s32.totalorder %s187, 1
      %s191 = scalar_select %p190, %s187, 1
      %s192 = smul.addr %s189, 16
      %s193 = sadd.s32 %s191, %s192
      %s194 = smul.addr %s193, 8
      %s195 = scalar_lea.vmem %s0, %s194
      %p196 = pneg %p57
      %p197 = pneg %p54
      %p198 = scmp.lt.s32.totalorder %s22, 0
      %s199 = scalar_select %p198, %s22, 0
      %s200 = smul.addr %s199, 2
      %s201 = scalar_lea.vmem %s1, %s200
      %p202 = pneg %p83
      %p203 = pneg %p80
      %p204 = pneg %p113
      %p205 = pneg %p110
      %s206 = smul.u32 2, %s21
      %p207 = scmp.lt.s32.totalorder %s20, 1
      %s208 = scalar_select %p207, %s20, 1
      %p209 = scmp.lt.s32.totalorder %s22, 0
      %s210 = scalar_select %p209, %s22, 0
      %p211 = scmp.lt.s32.totalorder %s206, 1
      %s212 = scalar_select %p211, %s206, 1
      %s213 = smul.addr %s210, 2
      %s214 = sadd.s32 %s212, %s213
      %s215 = smul.addr %s208, 2
      %s216 = sadd.s32 %s214, %s215
      %s217 = smul.addr %s216, 2
      %s218 = scalar_lea.vmem %s2, %s217
      %p219 = pneg %p141
      %p220 = pneg %p138
      %s221 = smul.u32 2, %s21
      %p222 = scmp.lt.s32.totalorder %s20, 1
      %s223 = scalar_select %p222, %s20, 1
      %p224 = scmp.lt.s32.totalorder %s221, 1
      %s225 = scalar_select %p224, %s221, 1
      %s226 = smul.addr %s223, 2
      %s227 = sadd.s32 %s225, %s226
      %s228 = scalar_lea.vmem %s3, %s227
      %s229 = smul.u32 2, %s21
      %p230 = scmp.lt.s32.totalorder %s20, 1
      %s231 = scalar_select %p230, %s20, 1
      %p232 = scmp.lt.s32.totalorder %s229, 1
      %s233 = scalar_select %p232, %s229, 1
      %s234 = smul.addr %s231, 16
      %s235 = sadd.s32 %s233, %s234
      %s236 = smul.addr %s235, 8
      %s237 = scalar_lea.vmem %s0, %s236
      %s238 = smul.u32 2, %s21
      %p239 = scmp.lt.s32.totalorder %s22, 0
      %s240 = scalar_select %p239, %s22, 0
      %s241 = smul.addr %s240, 2
      %s242 = scalar_lea.vmem %s1, %s241
      %s243 = smul.u32 2, %s21
      %p244 = scmp.lt.s32.totalorder %s20, 1
      %s245 = scalar_select %p244, %s20, 1
      %p246 = scmp.lt.s32.totalorder %s22, 0
      %s247 = scalar_select %p246, %s22, 0
      %p248 = scmp.lt.s32.totalorder %s243, 1
      %s249 = scalar_select %p248, %s243, 1
      %s250 = smul.addr %s247, 2
      %s251 = sadd.s32 %s249, %s250
      %s252 = smul.addr %s245, 2
      %s253 = sadd.s32 %s251, %s252
      %s254 = smul.addr %s253, 2
      %s255 = scalar_lea.vmem %s2, %s254
      %s256 = smul.u32 2, %s21
      %s257 = smul.u32 2, %s21
      %p258 = scmp.lt.s32.totalorder %s20, 1
      %s259 = scalar_select %p258, %s20, 1
      %p260 = scmp.lt.s32.totalorder %s257, 1
      %s261 = scalar_select %p260, %s257, 1
      %s262 = smul.addr %s259, 2
      %s263 = sadd.s32 %s261, %s262
      %s264 = scalar_lea.vmem %s3, %s263
      %s265 = smul.u32 2, %s21
      %v266 = vld [vmem:[%s242] sm:$0x3]
      %v267 = vld [vmem:[%s237] sm:$0xff]
      %v268 = vld [vmem:[%s237 + $0x8] sm:$0xff]
      %v269 = vld [vmem:[%s237 + $0x10] sm:$0xff]
      %v270 = vld [vmem:[%s237 + $0x18] sm:$0xff]
      %v271 = vld [vmem:[%s237 + $0x20] sm:$0xff]
      %v272 = vld [vmem:[%s237 + $0x28] sm:$0xff]
      %v273 = vld [vmem:[%s237 + $0x30] sm:$0xff]
      %v274 = vld [vmem:[%s237 + $0x38] sm:$0xff]
      %v275 = vld [vmem:[%s237 + $0x40] sm:$0xff]
      %v276 = vld [vmem:[%s237 + $0x48] sm:$0xff]
      %v277 = vld [vmem:[%s237 + $0x50] sm:$0xff]
      %v278 = vld [vmem:[%s237 + $0x58] sm:$0xff]
      %v279 = vld [vmem:[%s237 + $0x60] sm:$0xff]
      %v280 = vld [vmem:[%s237 + $0x68] sm:$0xff]
      %v281 = vld [vmem:[%s237 + $0x70] sm:$0xff]
      %v282 = vld [vmem:[%s237 + $0x78] sm:$0xff]
      %vm283 = vcmask 523264
      %v285 = vsel %vm283, %v266, 0
      %287 = vmatpush.msra.mxu0 0.0
      %288 = vmatpush.msra.mxu0 0.0
      %289 = vmatpush.msra.mxu0 0.0
      %290 = vmatpush.msra.mxu0 0.0
      %291 = vmatpush.msra.mxu0 0.0
      %292 = vmatpush.msra.mxu0 0.0
      %293 = vmatpush.msra.mxu0 0.0
      %294 = vmatpush.msra.mxu0 0.0
      %295 = vmatpush.msra.mxu0 %v281
      %296 = vmatpush.msra.mxu0 %v279
      %297 = vmatpush.msra.mxu0 %v277
      %298 = vmatpush.msra.mxu0 %v275
      %299 = vmatpush.msra.mxu0 %v273
      %300 = vmatpush.msra.mxu0 %v271
      %301 = vmatpush.msra.mxu0 %v269
      %302 = vmatpush.msra.mxu0 %v267
      %303 = vmatmul.f32.gmra.mxu0 %v285
      %v304 = vpop.f32.mrf.mxu0
      %v305 = vadd.f32 0.0, %v304
      %306 = vdwg.mxu0
      %307 = vmatpush.msra.mxu0 0.0
      %308 = vmatpush.msra.mxu0 0.0
      %309 = vmatpush.msra.mxu0 0.0
      %310 = vmatpush.msra.mxu0 0.0
      %311 = vmatpush.msra.mxu0 0.0
      %312 = vmatpush.msra.mxu0 0.0
      %313 = vmatpush.msra.mxu0 0.0
      %314 = vmatpush.msra.mxu0 0.0
      %315 = vmatpush.msra.mxu0 %v282
      %316 = vmatpush.msra.mxu0 %v280
      %317 = vmatpush.msra.mxu0 %v278
      %318 = vmatpush.msra.mxu0 %v276
      %319 = vmatpush.msra.mxu0 %v274
      %320 = vmatpush.msra.mxu0 %v272
      %321 = vmatpush.msra.mxu0 %v270
      %322 = vmatpush.msra.mxu0 %v268
      %323 = vmatmul.f32.gmra.mxu0 %v285
      %v324 = vpop.f32.mrf.mxu0
      %v325 = vadd.f32 0.0, %v324
      %326 = vdwg.mxu0
      %v327 = vmul.f32 %v305, 6.0
      %v328 = vmul.f32 %v325, 6.0
      %v329 = vadd.f32 %v327, -4.0
      %v330 = vadd.f32 %v328, -4.0
      %v331 = vmul.f32 %v329, 0.5
      %v332 = vmul.f32 %v330, 0.5
      %v333 = vtanh.pop %v331
      %v334 = vtanh.pop %v332
      %v335 = vadd.f32 %v333, 1.0
      %v336 = vadd.f32 %v334, 1.0
      %v337 = vmul.f32 %v335, 0.5
      %v338 = vmul.f32 %v336, 0.5
      %v341 = vrot.slane %v338, 6
      %vm342 = vcmask 1041408
      %v343 = vsel %vm342, %v337, %v341
      %345 = vst [vmem:[%s255] sm:$0xf] %v343
      %s346 = smul.u32 %s22, 2
      %p347 = scmp.ge.s32.totalorder %s20, %s346
      %s348 = sadd.s32 %s346, 2
      %p349 = scmp.lt.s32.totalorder %s20, %s348
      %p350 = pnand %p347, %p349
      %p351 = pneg %p350
      // Predicated region
      $region29: #{masker_forward.1} parent=27 // pred_check
        _
      $region30: #{masker_forward.1} parent=27 // pred_check_branch
        %353 = sbr.rel (%p350) target = $region32
      $region31: #{masker_forward.1} parent=27 // pred_region
        %v354 = vlaneseq
        %v355 = vshrl.u32 %v354, 7
        %v356 = vstv %s346
        %v357 = vadd.s32 %v356, %v355
        %v358 = vstv %s20
        %vm359 = vcmp.eq.s32.totalorder %v357, %v358
        %v360 = vsel %vm359, %v337, 0.0
        %v361 = vsel %vm359, %v338, 0.0
        %v362 = vsel %vm342, %v360, 0.0
        %v363 = vrot.slane %v362, 4
        %v364 = vadd.f32 %v362, %v363
        %v365 = vrot.slane %v364, 2
        %v366 = vadd.f32 %v364, %v365
        %v367 = vrot.slane %v366, 1
        %v368 = vadd.f32 %v366, %v367
        %v369 = vsel %vm342, %v361, 0.0
        %v370 = vrot.slane %v369, 4
        %v371 = vadd.f32 %v369, %v370
        %v372 = vrot.slane %v371, 2
        %v373 = vadd.f32 %v371, %v372
        %v374 = vrot.slane %v373, 1
        %v375 = vadd.f32 %v373, %v374
        %v378 = vrot.slane %v375, 7
        %vm379 = vcmask 1040384
        %v380 = vsel %vm379, %v368, %v378
        %v382 = vlaneseq
        %vm383 = vcmp.ge.s32.totalorder %v382, 0
        %vm384 = vcmp.lt.s32.totalorder %v382, 256
        %vm385 = vmand %vm383, %vm384
        %386 = vst.msk [vmem:[%s264] sm:$0x3] %vm385, %v380
      $region32: #{masker_forward.1} parent=27 // pred_fallthru
        _
      %s387 = smul.u32 2, %s21
      %p388 = scmp.lt.s32.totalorder %s20, 1
      %s389 = scalar_select %p388, %s20, 1
      %p390 = scmp.lt.s32.totalorder %s22, 0
      %s391 = scalar_select %p390, %s22, 0
      %p392 = scmp.lt.s32.totalorder %s387, 1
      %s393 = scalar_select %p392, %s387, 1
      %s394 = smul.addr %s391, 2
      %s395 = sadd.s32 %s393, %s394
      %s396 = smul.addr %s389, 2
      %s397 = sadd.s32 %s395, %s396
      %s398 = smul.addr %s397, 2
      %s399 = scalar_lea.vmem %s2, %s398
      %s400 = smul.u32 2, %s21
      %p401 = scmp.lt.s32.totalorder %s20, 1
      %s402 = scalar_select %p401, %s20, 1
      %p403 = scmp.lt.s32.totalorder %s400, 1
      %s404 = scalar_select %p403, %s400, 1
      %s405 = smul.addr %s402, 2
      %s406 = sadd.s32 %s404, %s405
      %s407 = scalar_lea.vmem %s3, %s406
      // Predicated region
      $region33: #{masker_forward.1} parent=27 // pred_check
        %p408 = pneg %p110
      $region34: #{masker_forward.1} parent=27 // pred_check_branch
        %410 = sbr.rel (%p408) target = $region36
      $region35: #{masker_forward.1} parent=27 // pred_region
        %s411 = smul.u32 2, %s21
      $region36: #{masker_forward.1} parent=27 // pred_fallthru
        _
      // Predicated region
      $region37: #{masker_forward.1} parent=27 // pred_check
        %p412 = pneg %p138
      $region38: #{masker_forward.1} parent=27 // pred_check_branch
        %414 = sbr.rel (%p412) target = $region40
      $region39: #{masker_forward.1} parent=27 // pred_region
        %s415 = smul.u32 2, %s21
      $region40: #{masker_forward.1} parent=27 // pred_fallthru
        _
    $region28: #{masker_forward.1} parent=5 // pred_fallthru
      _
    %p416 = scmp.le.s32.totalorder 2, %s10
    // Predicated region
    $region41: #{masker_forward.1} parent=5 // pred_check
      %p417 = pneg %p416
    $region42: #{masker_forward.1} parent=5 // pred_check_branch
      %419 = sbr.rel (%p417) target = $region44
    $region43: #{masker_forward.1} parent=5 // pred_region
      %s420 = ssub.s32 %s10, 2
      // Predicated region
      $region45: #{masker_forward.1} parent=43 // pred_check
        %p421 = pneg %p116
      $region46: #{masker_forward.1} parent=43 // pred_check_branch
        %423 = sbr.rel (%p421) target = $region48
      $region47: #{masker_forward.1} parent=43 // pred_region
        %s424 = smul.u32 2, %s24
        %p425 = scmp.lt.s32.totalorder %s23, 1
        %s426 = scalar_select %p425, %s23, 1
        %p427 = scmp.lt.s32.totalorder %s25, 0
        %s428 = scalar_select %p427, %s25, 0
        %p429 = scmp.lt.s32.totalorder %s424, 1
        %s430 = scalar_select %p429, %s424, 1
        %s431 = smul.addr %s428, 2
        %s432 = sadd.s32 %s430, %s431
        %s433 = smul.addr %s426, 2
        %s434 = sadd.s32 %s432, %s433
        %s435 = smul.addr %s434, 2
        %s436 = scalar_lea.vmem %s2, %s435
      $region48: #{masker_forward.1} parent=43 // pred_fallthru
        _
      // Predicated region
      $region49: #{masker_forward.1} parent=43 // pred_check
        %p437 = pneg %p144
      $region50: #{masker_forward.1} parent=43 // pred_check_branch
        %439 = sbr.rel (%p437) target = $region52
      $region51: #{masker_forward.1} parent=43 // pred_region
        %s440 = smul.u32 2, %s24
        %p441 = scmp.lt.s32.totalorder %s23, 1
        %s442 = scalar_select %p441, %s23, 1
        %p443 = scmp.lt.s32.totalorder %s440, 1
        %s444 = scalar_select %p443, %s440, 1
        %s445 = smul.addr %s442, 2
        %s446 = sadd.s32 %s444, %s445
        %s447 = scalar_lea.vmem %s3, %s446
      $region52: #{masker_forward.1} parent=43 // pred_fallthru
        _
    $region44: #{masker_forward.1} parent=5 // pred_fallthru
      _
  $region6: #{masker_forward.1} parent=0 // loop_footer
    %s14 = sadd.s32 1, %s10
  $region7: #{masker_forward.1} parent=0 // loop_footer_branch
    %9 = sbr.rel target = $region3
  $region8: #{masker_forward.1} parent=0 // loop_exit
    _

</llo_original>
